<compile_context>
chip_gen: v5e
topology: v5e:2x2
jax: 0.10.0
libtpu: 0.0.40
codegen_flags: <defaults>
</compile_context>

<pallas_src>
import jax
import jax.numpy as jnp
from jax.experimental import pallas as pl
from jax.experimental.pallas import tpu as pltpu

LANES = 128


def _sublane_align(*dtypes):
    # 8 sublanes for 4-byte dtypes, 16 for 2-byte, 32 for 1-byte.
    return max(8, *(32 // jnp.dtype(d).itemsize for d in dtypes))


def _make_kernel(tile_rows, n_valid_rows, n_blocks):
    needs_mask = n_blocks * tile_rows != n_valid_rows

    def kernel(pred_ref, y_ref, out_ref):
        i = pl.program_id(0)

        y = y_ref[...].astype(jnp.float32)
        p = pred_ref[...].astype(jnp.float32)

        # Piecewise weights as a sum of step functions (cheap VPU chain):
        #   y<2 -> 1, [2,5) -> 2, [5,10) -> 5, [10,30) -> 10
        w = (1.0
             + (y >= 2.0).astype(jnp.float32)
             + 3.0 * (y >= 5.0).astype(jnp.float32)
             + 5.0 * (y >= 10.0).astype(jnp.float32))
        # torch leaves y == 30.0 at the zero init; y > 30 -> 30.
        w = jnp.where(y == 30.0, 0.0, w)
        w = jnp.where(y > 30.0, 30.0, w)

        contrib = w * jnp.abs(y - p)

        if needs_mask:
            # Final grid block overruns the array; zero out undefined rows.
            row_ids = i * tile_rows + jax.lax.broadcasted_iota(
                jnp.int32, (tile_rows, LANES), 0)
            contrib = jnp.where(row_ids < n_valid_rows, contrib, 0.0)

        # Fold to a single (8, 128) vreg slab with pure VPU adds; the
        # cross-lane/sublane reduce is deferred to the wrapper (once).
        folded = contrib.reshape(tile_rows // 8, 8, LANES).sum(axis=0)
        out_ref[0] = folded

    return kernel


def bmae_loss(pred, y, *, tile_rows=2048):
    """Weighted-MAE loss (BMAEloss.forward). Returns a float32 scalar."""
    assert pred.shape == y.shape
    pred_f = pred.reshape(-1)
    y_f = y.reshape(-1)
    total = pred_f.shape[0]

    align = _sublane_align(pred.dtype, y.dtype)
    align_elems = align * LANES
    pad = (-total) % align_elems
    if pad:
        # Only hit when total isn't a multiple of align*128 (rare for image
        # tensors).  Zero padding contributes exactly 0 (y=0 -> w=1, |y-p|=0).
        pred_f = jnp.pad(pred_f, (0, pad))
        y_f = jnp.pad(y_f, (0, pad))

    rows = (total + pad) // LANES                       # multiple of `align`
    tile_rows = max(align, min((int(tile_rows) // align) * align, rows))
    n_blocks = pl.cdiv(rows, tile_rows)

    pred2 = pred_f.reshape(rows, LANES)
    y2 = y_f.reshape(rows, LANES)

    partials = pl.pallas_call(
        _make_kernel(tile_rows, rows, n_blocks),
        out_shape=jax.ShapeDtypeStruct((n_blocks, 8, LANES), jnp.float32),
        grid=(n_blocks,),
        in_specs=[
            pl.BlockSpec((tile_rows, LANES), lambda i: (i, 0)),
            pl.BlockSpec((tile_rows, LANES), lambda i: (i, 0)),
        ],
        out_specs=pl.BlockSpec((1, 8, LANES), lambda i: (i, 0, 0)),
        compiler_params=pltpu.CompilerParams(
            dimension_semantics=("parallel",),
        ),
    )(pred2, y2)

    # Tiny final reduction over the per-block partials.
    return jnp.sum(partials)


def _bmae_ref(pred, y):
    """Pure-JAX reference matching the torch module."""
    y = y.astype(jnp.float32)
    pred = pred.astype(jnp.float32)
    mask = jnp.zeros_like(y)
    mask = jnp.where(y < 2.0, 1.0, mask)
    mask = jnp.where((y >= 2.0) & (y < 5.0), 2.0, mask)
    mask = jnp.where((y >= 5.0) & (y < 10.0), 5.0, mask)
    mask = jnp.where((y >= 10.0) & (y < 30.0), 10.0, mask)
    mask = jnp.where(y > 30.0, 30.0, mask)
    return jnp.sum(mask * jnp.abs(y - pred))


if __name__ == "__main__":
    key = jax.random.PRNGKey(0)
    k1, k2 = jax.random.split(key)

    # Primary NCHW-like case: batch=2, channels=4, spatial=16x16.
    shape = (2, 4, 16, 16)
    y = jax.random.uniform(k1, shape, jnp.float32, minval=0.0, maxval=40.0)
    pred = y + jax.random.normal(k2, shape, jnp.float32)

    loss = bmae_loss(pred, y)
    jax.block_until_ready(loss)
    ref = _bmae_ref(pred, y)
    assert jnp.allclose(loss, ref, rtol=1e-5, atol=1e-3), (loss, ref)

    # Multi-block grid with a partial (masked) last block.
    k3, k4 = jax.random.split(k2)
    shape2 = (3, 1, 32, 32)   # 3072 elems -> 24 rows; tile_rows=16 -> 2 blocks
    y2 = jax.random.uniform(k3, shape2, jnp.float32, minval=0.0, maxval=40.0)
    p2 = y2 + jax.random.normal(k4, shape2, jnp.float32)
    loss2 = bmae_loss(p2, y2, tile_rows=16)
    jax.block_until_ready(loss2)
    assert jnp.allclose(loss2, _bmae_ref(p2, y2), rtol=1e-5, atol=1e-3)

    # Ragged size (needs the small zero-pad path).
    k5, k6 = jax.random.split(k4)
    shape3 = (2, 3, 7, 11)    # 462 elems -> padded to 1024
    y3 = jax.random.uniform(k5, shape3, jnp.float32, minval=0.0, maxval=40.0)
    p3 = y3 + jax.random.normal(k6, shape3, jnp.float32)
    loss3 = bmae_loss(p3, y3)
    jax.block_until_ready(loss3)
    assert jnp.allclose(loss3, _bmae_ref(p3, y3), rtol=1e-5, atol=1e-3)

    print("KERNEL_OK")
</pallas_src>

<mosaic_0001>
module attributes {stable_mosaic.version = 11 : i64} {
  func.func @kernel(%arg0: i32, %arg1: memref<16x128xf32, #tpu.memory_space<vmem>>, %arg2: memref<16x128xf32, #tpu.memory_space<vmem>>, %arg3: memref<1x8x128xf32, #tpu.memory_space<vmem>>) attributes {dimension_semantics = [#tpu.dimension_semantics<parallel>], iteration_bounds = array<i64: 1>, scalar_prefetch = 0 : i64, scratch_operands = 0 : i64, tpu.core_type = #tpu.core_type<tc>, window_params = [{transform_indices = @transform_0, window_bounds = array<i64: 16, 128>}, {transform_indices = @transform_1, window_bounds = array<i64: 16, 128>}, {transform_indices = @transform_2, window_bounds = array<i64: 1, 8, 128>}]} {
    %c0 = arith.constant 0 : index
    %c0_0 = arith.constant 0 : index
    %0 = vector.load %arg2[%c0, %c0_0] : memref<16x128xf32, #tpu.memory_space<vmem>>, vector<16x128xf32>
    %c0_1 = arith.constant 0 : index
    %c0_2 = arith.constant 0 : index
    %1 = vector.load %arg1[%c0_1, %c0_2] : memref<16x128xf32, #tpu.memory_space<vmem>>, vector<16x128xf32>
    %cst = arith.constant 2.000000e+00 : f32
    %2 = vector.broadcast %cst : f32 to vector<16x128xf32>
    %3 = arith.cmpf oge, %0, %2 : vector<16x128xf32>
    %4 = arith.extui %3 : vector<16x128xi1> to vector<16x128xi32>
    %5 = arith.sitofp %4 : vector<16x128xi32> to vector<16x128xf32>
    %cst_3 = arith.constant 1.000000e+00 : f32
    %6 = vector.broadcast %cst_3 : f32 to vector<16x128xf32>
    %7 = arith.addf %6, %5 : vector<16x128xf32>
    %cst_4 = arith.constant 5.000000e+00 : f32
    %8 = vector.broadcast %cst_4 : f32 to vector<16x128xf32>
    %9 = arith.cmpf oge, %0, %8 : vector<16x128xf32>
    %10 = arith.extui %9 : vector<16x128xi1> to vector<16x128xi32>
    %11 = arith.sitofp %10 : vector<16x128xi32> to vector<16x128xf32>
    %cst_5 = arith.constant 3.000000e+00 : f32
    %12 = vector.broadcast %cst_5 : f32 to vector<16x128xf32>
    %13 = arith.mulf %12, %11 : vector<16x128xf32>
    %14 = arith.addf %7, %13 : vector<16x128xf32>
    %cst_6 = arith.constant 1.000000e+01 : f32
    %15 = vector.broadcast %cst_6 : f32 to vector<16x128xf32>
    %16 = arith.cmpf oge, %0, %15 : vector<16x128xf32>
    %17 = arith.extui %16 : vector<16x128xi1> to vector<16x128xi32>
    %18 = arith.sitofp %17 : vector<16x128xi32> to vector<16x128xf32>
    %cst_7 = arith.constant 5.000000e+00 : f32
    %19 = vector.broadcast %cst_7 : f32 to vector<16x128xf32>
    %20 = arith.mulf %19, %18 : vector<16x128xf32>
    %21 = arith.addf %14, %20 : vector<16x128xf32>
    %cst_8 = arith.constant 3.000000e+01 : f32
    %22 = vector.broadcast %cst_8 : f32 to vector<16x128xf32>
    %23 = arith.cmpf oeq, %0, %22 : vector<16x128xf32>
    %cst_9 = arith.constant 0.000000e+00 : f32
    %24 = vector.broadcast %cst_9 : f32 to vector<16x128xf32>
    %25 = arith.select %23, %24, %21 : vector<16x128xi1>, vector<16x128xf32>
    %cst_10 = arith.constant 3.000000e+01 : f32
    %26 = vector.broadcast %cst_10 : f32 to vector<16x128xf32>
    %27 = arith.cmpf ogt, %0, %26 : vector<16x128xf32>
    %cst_11 = arith.constant 3.000000e+01 : f32
    %28 = vector.broadcast %cst_11 : f32 to vector<16x128xf32>
    %29 = arith.select %27, %28, %25 : vector<16x128xi1>, vector<16x128xf32>
    %30 = arith.subf %0, %1 : vector<16x128xf32>
    %31 = math.absf %30 : vector<16x128xf32>
    %32 = arith.mulf %29, %31 : vector<16x128xf32>
    %33 = vector.shape_cast %32 : vector<16x128xf32> to vector<2x8x128xf32>
    %cst_12 = arith.constant dense<0.000000e+00> : vector<8x128xf32>
    %34 = vector.multi_reduction <add>, %33, %cst_12 [0] : vector<2x8x128xf32> to vector<8x128xf32>
    %c0_13 = arith.constant 0 : index
    %c0_14 = arith.constant 0 : index
    %c0_15 = arith.constant 0 : index
    %35 = vector.load %arg3[%c0_13, %c0_14, %c0_15] : memref<1x8x128xf32, #tpu.memory_space<vmem>>, vector<1x8x128xf32>
    %36 = vector.shape_cast %35 : vector<1x8x128xf32> to vector<8x128xf32>
    %37 = vector.shape_cast %34 : vector<8x128xf32> to vector<1x8x128xf32>
    tpu.vector_store %arg3[%c0_13, %c0_14, %c0_15], %37 {strides = array<i32>} : memref<1x8x128xf32, #tpu.memory_space<vmem>>, vector<1x8x128xf32>,
    return
  }
  func.func @transform_0(%arg0: i32) -> (i32, i32) {
    %c0_i32 = arith.constant 0 : i32
    %c0_i32_0 = arith.constant 0 : i32
    return %arg0, %c0_i32 : i32, i32
  }
  func.func @transform_1(%arg0: i32) -> (i32, i32) {
    %c0_i32 = arith.constant 0 : i32
    %c0_i32_0 = arith.constant 0 : i32
    return %arg0, %c0_i32 : i32, i32
  }
  func.func @transform_2(%arg0: i32) -> (i32, i32, i32) {
    %c0_i32 = arith.constant 0 : i32
    %c0_i32_0 = arith.constant 0 : i32
    %c0_i32_1 = arith.constant 0 : i32
    return %arg0, %c0_i32, %c0_i32_0 : i32, i32, i32
  }
}

</mosaic_0001>

<llo_original>
// kernel: tpu_custom_call.1
$region0: #{tpu_custom_call.1}
  #allocation0 [shape = 'u32[]', space=smem, size = 0x4, offset = 0x4, fixed_abs, tag = 'smem constant byte address 0x4 - core index']
  #allocation1 [shape = 'u32[72,128]{1,0:T(1,128)}', space=vmem, size = 0x9000, scoped, tag = 'internal scratch']
  %s0 = inlined_call_operand.hbm [shape: f32[16,128], index: 0, kind: input, shape index: {}]
  %s1 = inlined_call_operand.hbm [shape: f32[16,128], index: 1, kind: input, shape index: {}]
  %s2 = inlined_call_operand.hbm [shape: f32[1,8,128], index: 2, kind: output, shape index: {}]
  %s3 = sld [smem:[#allocation0]]
  $region26: #{tpu_custom_call.1} parent=0
    _
  %s5 = ssub.s32 1, %s3
  %s6 = scalar_select 0, %s5, %s3
  $region1: #{tpu_custom_call.1} parent=0
    #allocation2 [shape = 'u8[8192]{0}', space=vmem, size = 0x2000, scoped, tag = 'input window, operand 0, single buffered']
    #allocation3 [shape = 's32[1]{0}', space=sflag, size = 0x4, scoped, tag = 'scoped memory for tpu_custom_call.1']
    #allocation4 [shape = 's32[1]{0}', space=sflag, size = 0x4, scoped, tag = 'scoped memory for tpu_custom_call.1']
    #allocation5 [shape = 'u8[8192]{0}', space=vmem, size = 0x2000, scoped, tag = 'input window, operand 1, single buffered']
    #allocation6 [shape = 's32[1]{0}', space=sflag, size = 0x4, scoped, tag = 'scoped memory for tpu_custom_call.1']
    #allocation7 [shape = 'u8[4096]{0}', space=vmem, size = 0x1000, scoped, tag = 'output window, operand 0, single buffered']
    %7 = vsyncpa [#allocation3], 0
    %8 = vsyncpa [#allocation6], 0
    %9 = vsyncpa [#allocation4], 0
    // Predicated region
    $region2: #{tpu_custom_call.1} parent=1 // pred_check
      _
    $region3: #{tpu_custom_call.1} parent=1 // pred_check_branch
      %11 = sbr.rel (0) target = $region5
    $region4: #{tpu_custom_call.1} parent=1 // pred_region
      %13 = vsyncadd [#allocation3], 0
      %s14 = sshll.u32 %s0, 4
      %s15 = int_to_ptr.hbm [resolvable:$true] %s14
      %s16 = sshll.u32 [#allocation2], 4
      %s17 = int_to_ptr.vmem [resolvable:$true] %s16
      %22 = dma.hbm_to_vmem [thread:$0]  %s15, 256, %s17, [#allocation3], 128, 128, 8
    $region5: #{tpu_custom_call.1} parent=1 // pred_fallthru
      _
    // Predicated region
    $region6: #{tpu_custom_call.1} parent=1 // pred_check
      _
    $region7: #{tpu_custom_call.1} parent=1 // pred_check_branch
      %24 = sbr.rel (0) target = $region9
    $region8: #{tpu_custom_call.1} parent=1 // pred_region
      %26 = vsyncadd [#allocation6], 0
      %s27 = sshll.u32 %s1, 4
      %s28 = int_to_ptr.hbm [resolvable:$true] %s27
      %s29 = sshll.u32 [#allocation5], 4
      %s30 = int_to_ptr.vmem [resolvable:$true] %s29
      %35 = dma.hbm_to_vmem [thread:$0]  %s28, 256, %s30, [#allocation6], 128, 128, 8
    $region9: #{tpu_custom_call.1} parent=1 // pred_fallthru
      _
    // Predicated region
    $region10: #{tpu_custom_call.1} parent=1 // pred_check
      _
    $region11: #{tpu_custom_call.1} parent=1 // pred_check_branch
      %37 = sbr.rel (0) target = $region13
    $region12: #{tpu_custom_call.1} parent=1 // pred_region
      %39 = dma.done [#allocation3], 256
    $region13: #{tpu_custom_call.1} parent=1 // pred_fallthru
      _
    // Predicated region
    $region14: #{tpu_custom_call.1} parent=1 // pred_check
      _
    $region15: #{tpu_custom_call.1} parent=1 // pred_check_branch
      %41 = sbr.rel (0) target = $region17
    $region16: #{tpu_custom_call.1} parent=1 // pred_region
      %43 = dma.done [#allocation6], 256
    $region17: #{tpu_custom_call.1} parent=1 // pred_fallthru
      _
    %v44 = vld [vmem:[#allocation5] sm:$0xff]
    %v45 = vld [vmem:[#allocation5 + $0x8] sm:$0xff]
    %v46 = vld [vmem:[#allocation2] sm:$0xff]
    %v47 = vld [vmem:[#allocation2 + $0x8] sm:$0xff]
    %vm48 = vcmp.ge.f32.partialorder %v44, 2.0
    %vm49 = vcmp.ge.f32.partialorder %v45, 2.0
    %v50 = vsel %vm48, 1, 0
    %v51 = vsel %vm49, 1, 0
    %v52 = vcvt.s32.f32 %v50
    %v53 = vcvt.s32.f32 %v51
    %v54 = vadd.f32 %v52, 1.0
    %v55 = vadd.f32 %v53, 1.0
    %vm56 = vcmp.ge.f32.partialorder %v44, 5.0
    %vm57 = vcmp.ge.f32.partialorder %v45, 5.0
    %v58 = vsel %vm56, 1, 0
    %v59 = vsel %vm57, 1, 0
    %v60 = vcvt.s32.f32 %v58
    %v61 = vcvt.s32.f32 %v59
    %v62 = vmul.f32 %v60, 3.0
    %v63 = vmul.f32 %v61, 3.0
    %v64 = vadd.f32 %v54, %v62
    %v65 = vadd.f32 %v55, %v63
    %vm66 = vcmp.ge.f32.partialorder %v44, 10.0
    %vm67 = vcmp.ge.f32.partialorder %v45, 10.0
    %v68 = vsel %vm66, 1, 0
    %v69 = vsel %vm67, 1, 0
    %v70 = vcvt.s32.f32 %v68
    %v71 = vcvt.s32.f32 %v69
    %v72 = vmul.f32 %v70, 5.0
    %v73 = vmul.f32 %v71, 5.0
    %v74 = vadd.f32 %v64, %v72
    %v75 = vadd.f32 %v65, %v73
    %vm76 = vcmp.eq.f32.partialorder %v44, 30.0
    %vm77 = vcmp.eq.f32.partialorder %v45, 30.0
    %v78 = vsel %vm76, 0.0, %v74
    %v79 = vsel %vm77, 0.0, %v75
    %vm80 = vcmp.gt.f32.partialorder %v44, 30.0
    %vm81 = vcmp.gt.f32.partialorder %v45, 30.0
    %v82 = vsel %vm80, 30.0, %v78
    %v83 = vsel %vm81, 30.0, %v79
    %v84 = vsub.f32 %v44, %v46
    %v85 = vsub.f32 %v45, %v47
    %v86 = vand.u32 2147483647, %v84
    %v87 = vand.u32 2147483647, %v85
    %v88 = vmul.f32 %v82, %v86
    %v89 = vmul.f32 %v83, %v87
    %v90 = vadd.f32 %v88, %v89
    %91 = vst [vmem:[#allocation7] sm:$0xff] %v90
    // Predicated region
    $region18: #{tpu_custom_call.1} parent=1 // pred_check
      _
    $region19: #{tpu_custom_call.1} parent=1 // pred_check_branch
      %93 = sbr.rel (0) target = $region21
    $region20: #{tpu_custom_call.1} parent=1 // pred_region
      %95 = vsyncadd [#allocation4], 0
      %s97 = sshll.u32 [#allocation7], 4
      %s98 = int_to_ptr.vmem [resolvable:$true] %s97
      %s99 = sshll.u32 %s2, 4
      %s100 = int_to_ptr.hbm [resolvable:$true] %s99
      %102 = dma.vmem_to_hbm [thread:$0]  %s98, 128, %s100, [#allocation4]
    $region21: #{tpu_custom_call.1} parent=1 // pred_fallthru
      _
    // Predicated region
    $region22: #{tpu_custom_call.1} parent=1 // pred_check
      _
    $region23: #{tpu_custom_call.1} parent=1 // pred_check_branch
      %104 = sbr.rel (0) target = $region25
    $region24: #{tpu_custom_call.1} parent=1 // pred_region
      %106 = dma.done [#allocation4], 128
    $region25: #{tpu_custom_call.1} parent=1 // pred_fallthru
      _
    %107 = vsyncpa [#allocation3], 1
    %108 = vsyncpa [#allocation6], 1
    %109 = vsyncpa [#allocation4], 1

</llo_original>
